<compile_context>
chip_gen: v7x
topology: tpu7x:2x2x1
jax: 0.10.0
libtpu: 0.0.40
codegen_flags: <defaults>
</compile_context>

<pallas_src>
import functools

import jax
import jax.numpy as jnp
from jax.experimental import pallas as pl
from jax.experimental.pallas import tpu as pltpu

EMD_DIM = 200
_LANE = 128


def _round_up(x, m):
    return (x + m - 1) // m * m


def _vmem_capacity_bytes():
    """Per-chip VMEM capacity; conservative fallback if the query fails."""
    try:
        cap = getattr(pltpu.get_tpu_info(), "vmem_capacity_bytes", None)
        if cap:
            return int(cap)
    except Exception:
        pass
    return 64 * 1024 * 1024  # v7x per-TensorCore VMEM (smallest current part)


def atom_encoder_kernel(x_ref, emb_ref, out_ref, *, n_features):
    # x_ref  : [TN, C]           int32 node-feature tile
    # emb_ref: [C, V_pad, H_pad] zero-padded embedding tables (bf16 or f32)
    # out_ref: [TN, H_pad]       output tile (lane-dense: H_pad % 128 == 0)
    tn = x_ref.shape[0]
    v_pad = emb_ref.shape[1]
    h_pad = out_ref.shape[1]

    x = x_ref[...]                                                  # [TN, C]
    # Single hoisted iota over the padded vocab, shared by every feature.
    v_iota = jax.lax.broadcasted_iota(jnp.int32, (tn, v_pad), 1)    # [TN, Vp]

    acc = jnp.zeros((tn, h_pad), jnp.float32)
    for i in range(n_features):
        # int32 compare against the shared iota, one cast to the table dtype
        # (one-hot is exact in bf16), then one MXU matmul of depth V_pad.
        onehot = (x[:, i:i + 1] == v_iota).astype(emb_ref.dtype)    # [TN, Vp]
        acc = acc + jnp.dot(onehot, emb_ref[i],
                            preferred_element_type=jnp.float32)
    out_ref[...] = acc.astype(out_ref.dtype)


def atom_encoder(x, emb_tables, *, tile_n=1024, compute_dtype=jnp.bfloat16,
                 out_dtype=jnp.float32):
    """x: [N, C] ints, emb_tables: [C, V, H] float -> [N, H] out_dtype."""
    n, c = x.shape
    c2, v, h = emb_tables.shape
    assert c == c2

    v_pad = _round_up(max(v, 256), 256)        # clean 256-deep MXU passes
    h_pad = _round_up(h, _LANE)                # lane-dense output stores
    itemsize = jnp.dtype(compute_dtype).itemsize
    lanes_c = _round_up(c, _LANE)              # x tile pads C to 128 lanes

    # Per-chip VMEM budget (also communicated to the compiler below).
    cap = _vmem_capacity_bytes()
    budget = max(16 * 1024 * 1024, min(3 * cap // 4, cap - 8 * 1024 * 1024))

    def vmem_bytes(tn):
        table = 2 * c * v_pad * h_pad * itemsize         # table (2 buffers)
        io = 2 * tn * lanes_c * 4 + 2 * tn * h_pad * 4   # x / out tiles
        scratch = (tn * lanes_c * 4                      # x loaded into vregs
                   + tn * v_pad * 4                      # hoisted v_iota
                   + 2 * tn * v_pad * 4                  # mask + one-hot live
                   + 2 * tn * h_pad * 4)                 # f32 acc + dot result
        return table + io + scratch

    # tile_n: multiple of 8, no larger than (padded) N, fits the VMEM budget.
    tile_n = _round_up(min(max(tile_n, 8), _round_up(n, 8)), 8)
    while tile_n > 8 and vmem_bytes(tile_n) > budget:
        tile_n = _round_up(tile_n // 2, 8)
    # Keep >= 2 grid steps when N allows, so both v7x TensorCores get work.
    while tile_n > 8 and pl.cdiv(n, tile_n) < 2:
        tile_n = _round_up(tile_n // 2, 8)

    n_pad = _round_up(n, tile_n)
    grid = (n_pad // tile_n,)

    # --- host-side layout prep: pad, cast (cheap, jit-fusable) --------------
    x_i32 = x.astype(jnp.int32)
    if n_pad == n:
        x_p = x_i32
    else:
        x_p = jnp.zeros((n_pad, c), jnp.int32).at[:n].set(x_i32)

    if (v_pad, h_pad) == (v, h) and emb_tables.dtype == jnp.dtype(compute_dtype):
        emb_p = emb_tables
    else:
        emb_p = (jnp.zeros((c, v_pad, h_pad), compute_dtype)
                 .at[:, :v, :h].set(emb_tables.astype(compute_dtype)))

    cost = pl.CostEstimate(
        flops=2 * n_pad * c * v_pad * h_pad,
        transcendentals=0,
        bytes_accessed=(n_pad * c * 4
                        + n_pad * h_pad * jnp.dtype(out_dtype).itemsize
                        + c * v_pad * h_pad * itemsize),
    )

    out = pl.pallas_call(
        functools.partial(atom_encoder_kernel, n_features=c),
        out_shape=jax.ShapeDtypeStruct((n_pad, h_pad), out_dtype),
        grid_spec=pltpu.PrefetchScalarGridSpec(
            num_scalar_prefetch=0,
            grid=grid,
            in_specs=[
                pl.BlockSpec((tile_n, c), lambda i: (i, 0)),
                # Constant index_map: the padded table block is fetched once
                # and stays resident across the whole grid.
                pl.BlockSpec((c, v_pad, h_pad), lambda i: (0, 0, 0)),
            ],
            out_specs=pl.BlockSpec((tile_n, h_pad), lambda i: (i, 0)),
        ),
        compiler_params=pltpu.CompilerParams(
            dimension_semantics=("parallel",),
            vmem_limit_bytes=int(budget)),
        cost_estimate=cost,
    )(x_p, emb_p)

    if n_pad != n or h_pad != h:
        out = out[:n, :h]
    return out


def init_embeddings(key, in_channels, hidden):
    """Xavier-uniform init, matching torch.nn.init.xavier_uniform_ on [V, H]."""
    bound = (6.0 / (EMD_DIM + hidden)) ** 0.5
    keys = jax.random.split(key, in_channels)
    tables = [
        jax.random.uniform(k, (EMD_DIM, hidden), jnp.float32,
                           minval=-bound, maxval=bound)
        for k in keys
    ]
    return jnp.stack(tables, axis=0)  # [C, V, H]


def atom_encoder_ref(x, emb_tables):
    # Pure-JAX reference of the PyTorch forward.
    out = 0
    for i in range(x.shape[1]):
        out = out + emb_tables[i][x[:, i]]
    return out


if __name__ == "__main__":
    key = jax.random.PRNGKey(0)
    k_emb, k_x, k_x2 = jax.random.split(key, 3)

    C, H = 4, 32                 # 4 atom features, hidden = 32
    emb = init_embeddings(k_emb, C, H)                       # [C, 200, H] f32
    emb_bf16_ref = emb.astype(jnp.bfloat16).astype(jnp.float32)

    # --- small shape (single grid step) -------------------------------------
    N = 8
    x = jax.random.randint(k_x, (N, C), 0, EMD_DIM, jnp.int32)
    out = jax.block_until_ready(atom_encoder(x, emb))
    assert out.shape == (N, H)
    # Tight check vs the bf16-rounded tables (exactly what the kernel uses).
    assert jnp.allclose(out, atom_encoder_ref(x, emb_bf16_ref),
                        atol=1e-5, rtol=1e-5)
    # Loose check vs the f32 PyTorch-equivalent reference (bf16 table rounding
    # is the only deviation).
    assert jnp.allclose(out, atom_encoder_ref(x, emb), atol=5e-3, rtol=5e-2)

    # --- larger shape exercising padding + a multi-step parallel grid -------
    N2 = 300
    x2 = jax.random.randint(k_x2, (N2, C), 0, EMD_DIM, jnp.int32)
    out2 = jax.block_until_ready(atom_encoder(x2, emb))
    assert out2.shape == (N2, H)
    assert jnp.allclose(out2, atom_encoder_ref(x2, emb_bf16_ref),
                        atol=1e-5, rtol=1e-5)
    assert jnp.allclose(out2, atom_encoder_ref(x2, emb), atol=5e-3, rtol=5e-2)

    print("KERNEL_OK")
</pallas_src>

<mosaic_0001>
module attributes {stable_mosaic.version = 11 : i64} {
  func.func @atom_encoder_kernel(%arg0: i32, %arg1: memref<8x4xi32, #tpu.memory_space<vmem>>, %arg2: memref<4x256x128xbf16, #tpu.memory_space<vmem>>, %arg3: memref<8x128xf32, #tpu.memory_space<vmem>>) attributes {dimension_semantics = [#tpu.dimension_semantics<parallel>], iteration_bounds = array<i64: 1>, scalar_prefetch = 0 : i64, scratch_operands = 0 : i64, tpu.core_type = #tpu.core_type<tc>, window_params = [{transform_indices = @transform_0, window_bounds = array<i64: 8, 4>}, {pipeline_mode = #tpu.pipeline_mode<synchronous>, transform_indices = @transform_1, window_bounds = array<i64: 4, 256, 128>}, {transform_indices = @transform_2, window_bounds = array<i64: 8, 128>}]} {
    %c0 = arith.constant 0 : index
    %c0_0 = arith.constant 0 : index
    %0 = vector.load %arg1[%c0, %c0_0] : memref<8x4xi32, #tpu.memory_space<vmem>>, vector<8x4xi32>
    %1 = tpu.iota {dimensions = array<i32: 1>} : vector<8x256xi32>
    %cst = arith.constant 0.000000e+00 : f32
    %2 = vector.broadcast %cst : f32 to vector<8x128xf32>
    %3 = vector.extract_strided_slice %0 {offsets = [0, 0], sizes = [8, 1], strides = [1, 1]} : vector<8x4xi32> to vector<8x1xi32>
    %4 = vector.broadcast %3 : vector<8x1xi32> to vector<8x256xi32>
    %5 = arith.cmpi eq, %4, %1 : vector<8x256xi32>
    %6 = arith.extui %5 : vector<8x256xi1> to vector<8x256xi32>
    %7 = arith.sitofp %6 : vector<8x256xi32> to vector<8x256xf32>
    %8 = arith.truncf %7 : vector<8x256xf32> to vector<8x256xbf16>
    %c0_1 = arith.constant 0 : index
    %c0_2 = arith.constant 0 : index
    %c0_3 = arith.constant 0 : index
    %9 = vector.load %arg2[%c0_1, %c0_2, %c0_3] : memref<4x256x128xbf16, #tpu.memory_space<vmem>>, vector<1x256x128xbf16>
    %10 = vector.shape_cast %9 : vector<1x256x128xbf16> to vector<256x128xbf16>
    %cst_4 = arith.constant dense<0.000000e+00> : vector<8x128xf32>
    %11 = tpu.matmul %8, %10, %cst_4 {dimension_numbers = #tpu.dot_dimension_numbers<[1], [0], [0], [1], [0, 0, 1, 1], [], []>} : vector<8x256xbf16>, vector<256x128xbf16>, vector<8x128xf32> -> vector<8x128xf32>
    %12 = arith.addf %2, %11 : vector<8x128xf32>
    %13 = vector.extract_strided_slice %0 {offsets = [0, 1], sizes = [8, 1], strides = [1, 1]} : vector<8x4xi32> to vector<8x1xi32>
    %14 = vector.broadcast %13 : vector<8x1xi32> to vector<8x256xi32>
    %15 = arith.cmpi eq, %14, %1 : vector<8x256xi32>
    %16 = arith.extui %15 : vector<8x256xi1> to vector<8x256xi32>
    %17 = arith.sitofp %16 : vector<8x256xi32> to vector<8x256xf32>
    %18 = arith.truncf %17 : vector<8x256xf32> to vector<8x256xbf16>
    %c1 = arith.constant 1 : index
    %c0_5 = arith.constant 0 : index
    %c0_6 = arith.constant 0 : index
    %19 = vector.load %arg2[%c1, %c0_5, %c0_6] : memref<4x256x128xbf16, #tpu.memory_space<vmem>>, vector<1x256x128xbf16>
    %20 = vector.shape_cast %19 : vector<1x256x128xbf16> to vector<256x128xbf16>
    %cst_7 = arith.constant dense<0.000000e+00> : vector<8x128xf32>
    %21 = tpu.matmul %18, %20, %cst_7 {dimension_numbers = #tpu.dot_dimension_numbers<[1], [0], [0], [1], [0, 0, 1, 1], [], []>} : vector<8x256xbf16>, vector<256x128xbf16>, vector<8x128xf32> -> vector<8x128xf32>
    %22 = arith.addf %12, %21 : vector<8x128xf32>
    %23 = vector.extract_strided_slice %0 {offsets = [0, 2], sizes = [8, 1], strides = [1, 1]} : vector<8x4xi32> to vector<8x1xi32>
    %24 = vector.broadcast %23 : vector<8x1xi32> to vector<8x256xi32>
    %25 = arith.cmpi eq, %24, %1 : vector<8x256xi32>
    %26 = arith.extui %25 : vector<8x256xi1> to vector<8x256xi32>
    %27 = arith.sitofp %26 : vector<8x256xi32> to vector<8x256xf32>
    %28 = arith.truncf %27 : vector<8x256xf32> to vector<8x256xbf16>
    %c2 = arith.constant 2 : index
    %c0_8 = arith.constant 0 : index
    %c0_9 = arith.constant 0 : index
    %29 = vector.load %arg2[%c2, %c0_8, %c0_9] : memref<4x256x128xbf16, #tpu.memory_space<vmem>>, vector<1x256x128xbf16>
    %30 = vector.shape_cast %29 : vector<1x256x128xbf16> to vector<256x128xbf16>
    %cst_10 = arith.constant dense<0.000000e+00> : vector<8x128xf32>
    %31 = tpu.matmul %28, %30, %cst_10 {dimension_numbers = #tpu.dot_dimension_numbers<[1], [0], [0], [1], [0, 0, 1, 1], [], []>} : vector<8x256xbf16>, vector<256x128xbf16>, vector<8x128xf32> -> vector<8x128xf32>
    %32 = arith.addf %22, %31 : vector<8x128xf32>
    %33 = vector.extract_strided_slice %0 {offsets = [0, 3], sizes = [8, 1], strides = [1, 1]} : vector<8x4xi32> to vector<8x1xi32>
    %34 = vector.broadcast %33 : vector<8x1xi32> to vector<8x256xi32>
    %35 = arith.cmpi eq, %34, %1 : vector<8x256xi32>
    %36 = arith.extui %35 : vector<8x256xi1> to vector<8x256xi32>
    %37 = arith.sitofp %36 : vector<8x256xi32> to vector<8x256xf32>
    %38 = arith.truncf %37 : vector<8x256xf32> to vector<8x256xbf16>
    %c3 = arith.constant 3 : index
    %c0_11 = arith.constant 0 : index
    %c0_12 = arith.constant 0 : index
    %39 = vector.load %arg2[%c3, %c0_11, %c0_12] : memref<4x256x128xbf16, #tpu.memory_space<vmem>>, vector<1x256x128xbf16>
    %40 = vector.shape_cast %39 : vector<1x256x128xbf16> to vector<256x128xbf16>
    %cst_13 = arith.constant dense<0.000000e+00> : vector<8x128xf32>
    %41 = tpu.matmul %38, %40, %cst_13 {dimension_numbers = #tpu.dot_dimension_numbers<[1], [0], [0], [1], [0, 0, 1, 1], [], []>} : vector<8x256xbf16>, vector<256x128xbf16>, vector<8x128xf32> -> vector<8x128xf32>
    %42 = arith.addf %32, %41 : vector<8x128xf32>
    %c0_14 = arith.constant 0 : index
    %c0_15 = arith.constant 0 : index
    %43 = vector.load %arg3[%c0_14, %c0_15] : memref<8x128xf32, #tpu.memory_space<vmem>>, vector<8x128xf32>
    tpu.vector_store %arg3[%c0_14, %c0_15], %42 {strides = array<i32>} : memref<8x128xf32, #tpu.memory_space<vmem>>, vector<8x128xf32>,
    return
  }
  func.func @transform_0(%arg0: i32) -> (i32, i32) {
    %c0_i32 = arith.constant 0 : i32
    %c0_i32_0 = arith.constant 0 : i32
    return %arg0, %c0_i32 : i32, i32
  }
  func.func @transform_1(%arg0: i32) -> (i32, i32, i32) {
    %c0_i32 = arith.constant 0 : i32
    %c0_i32_0 = arith.constant 0 : i32
    %c0_i32_1 = arith.constant 0 : i32
    %c0_i32_2 = arith.constant 0 : i32
    return %c0_i32, %c0_i32_0, %c0_i32_1 : i32, i32, i32
  }
  func.func @transform_2(%arg0: i32) -> (i32, i32) {
    %c0_i32 = arith.constant 0 : i32
    %c0_i32_0 = arith.constant 0 : i32
    return %arg0, %c0_i32 : i32, i32
  }
}

</mosaic_0001>

<llo_original>
// kernel: tpu_custom_call.1
$region0: #{tpu_custom_call.1}
  #allocation0 [shape = 'u32[]', space=smem, size = 0x4, offset = 0x4, fixed_abs, tag = 'smem constant byte address 0x4 - core index']
  #allocation1 [shape = 'u32[144,128]{1,0:T(1,128)}', space=vmem, size = 0x12000, scoped, tag = 'internal scratch']
  %s0 = inlined_call_operand.vmem [shape: s32[8,4], index: 0, kind: input, shape index: {}]
  %s1 = inlined_call_operand.hbm [shape: bf16[4,256,128], index: 1, kind: input, shape index: {}]
  %s2 = inlined_call_operand.hbm [shape: f32[8,128], index: 2, kind: output, shape index: {}]
  %s3 = sld [smem:[#allocation0]]
  $region22: #{tpu_custom_call.1} parent=0
    _
  %s5 = ssub.s32 1, %s3
  %s6 = scalar_select 0, %s5, %s3
  $region1: #{tpu_custom_call.1} parent=0
    #allocation2 [shape = 'u8[262144]{0}', space=vmem, size = 0x40000, scoped, tag = 'input window, operand 1, single buffered']
    #allocation3 [shape = 's32[1]{0}', space=sflag, size = 0x4, scoped, tag = 'scoped memory for tpu_custom_call.1']
    #allocation4 [shape = 's32[1]{0}', space=sflag, size = 0x4, scoped, tag = 'scoped memory for tpu_custom_call.1']
    #allocation5 [shape = 'u8[4096]{0}', space=vmem, size = 0x1000, scoped, tag = 'output window, operand 0, single buffered']
    %7 = vsyncpa [#allocation3], 0
    %8 = vsyncpa [#allocation4], 0
    // Predicated region
    $region2: #{tpu_custom_call.1} parent=1 // pred_check
      _
    $region3: #{tpu_custom_call.1} parent=1 // pred_check_branch
      %10 = sbr.rel (0) target = $region5
    $region4: #{tpu_custom_call.1} parent=1 // pred_region
      _
    $region5: #{tpu_custom_call.1} parent=1 // pred_fallthru
      _
    // Predicated region
    $region6: #{tpu_custom_call.1} parent=1 // pred_check
      _
    $region7: #{tpu_custom_call.1} parent=1 // pred_check_branch
      %12 = sbr.rel (0) target = $region9
    $region8: #{tpu_custom_call.1} parent=1 // pred_region
      %s14 = ssub.s32 8192, 8192
      %15 = vsyncadd [#allocation3], %s14
      %s16 = sshll.u32 [#allocation2], 4
      %s17 = int_to_ptr.vmem [resolvable:$true] %s16
      %22 = dma.hbm_to_vmem [thread:$0]  %s1, 8192, %s17, [#allocation3], 64, 64, 4
    $region9: #{tpu_custom_call.1} parent=1 // pred_fallthru
      _
    // Predicated region
    $region10: #{tpu_custom_call.1} parent=1 // pred_check
      _
    $region11: #{tpu_custom_call.1} parent=1 // pred_check_branch
      %24 = sbr.rel (0) target = $region13
    $region12: #{tpu_custom_call.1} parent=1 // pred_region
      %25 = dma.done [#allocation3], 8192
    $region13: #{tpu_custom_call.1} parent=1 // pred_fallthru
      _
    %v27 = vld [vmem:[%s0] sm:$0xff]
    %v28 = vlaneseq
    %v29 = vand.u32 %v28, 127
    %v30 = vadd.s32 %v29, 128
    %31 = vset.pattern.permute.xlu0 0
    %32 = vperm.xlu0 %31, %v27
    %v33 = vpop.permute.xlu0 %32
    %vm34 = vcmp.eq.s32.totalorder %v33, %v29
    %vm35 = vcmp.eq.s32.totalorder %v33, %v30
    %v36 = vsel %vm34, 1, 0
    %v37 = vsel %vm35, 1, 0
    %v38 = vcvt.s32.f32 %v36
    %v39 = vcvt.s32.f32 %v37
    %v40 = vpack.c.bf16 %v38, %v38
    %v41 = vpack.c.bf16 %v39, %v39
    %v42 = vld [vmem:[#allocation2] sm:$0xf]
    %v43 = vld [vmem:[#allocation2 + $0x4] sm:$0xf]
    %v44 = vld [vmem:[#allocation2 + $0x8] sm:$0xf]
    %v45 = vld [vmem:[#allocation2 + $0xc] sm:$0xf]
    %v46 = vld [vmem:[#allocation2 + $0x10] sm:$0xf]
    %v47 = vld [vmem:[#allocation2 + $0x14] sm:$0xf]
    %v48 = vld [vmem:[#allocation2 + $0x18] sm:$0xf]
    %v49 = vld [vmem:[#allocation2 + $0x1c] sm:$0xf]
    %v50 = vld [vmem:[#allocation2 + $0x20] sm:$0xf]
    %v51 = vld [vmem:[#allocation2 + $0x24] sm:$0xf]
    %v52 = vld [vmem:[#allocation2 + $0x28] sm:$0xf]
    %v53 = vld [vmem:[#allocation2 + $0x2c] sm:$0xf]
    %v54 = vld [vmem:[#allocation2 + $0x30] sm:$0xf]
    %v55 = vld [vmem:[#allocation2 + $0x34] sm:$0xf]
    %v56 = vld [vmem:[#allocation2 + $0x38] sm:$0xf]
    %v57 = vld [vmem:[#allocation2 + $0x3c] sm:$0xf]
    %v58 = vld [vmem:[#allocation2 + $0x40] sm:$0xf]
    %v59 = vld [vmem:[#allocation2 + $0x44] sm:$0xf]
    %v60 = vld [vmem:[#allocation2 + $0x48] sm:$0xf]
    %v61 = vld [vmem:[#allocation2 + $0x4c] sm:$0xf]
    %v62 = vld [vmem:[#allocation2 + $0x50] sm:$0xf]
    %v63 = vld [vmem:[#allocation2 + $0x54] sm:$0xf]
    %v64 = vld [vmem:[#allocation2 + $0x58] sm:$0xf]
    %v65 = vld [vmem:[#allocation2 + $0x5c] sm:$0xf]
    %v66 = vld [vmem:[#allocation2 + $0x60] sm:$0xf]
    %v67 = vld [vmem:[#allocation2 + $0x64] sm:$0xf]
    %v68 = vld [vmem:[#allocation2 + $0x68] sm:$0xf]
    %v69 = vld [vmem:[#allocation2 + $0x6c] sm:$0xf]
    %v70 = vld [vmem:[#allocation2 + $0x70] sm:$0xf]
    %v71 = vld [vmem:[#allocation2 + $0x74] sm:$0xf]
    %v72 = vld [vmem:[#allocation2 + $0x78] sm:$0xf]
    %v73 = vld [vmem:[#allocation2 + $0x7c] sm:$0xf]
    %74 = vset.pattern.permute.xlu0 1
    %75 = vperm.xlu0 %74, %v27
    %v76 = vpop.permute.xlu0 %75
    %vm77 = vcmp.eq.s32.totalorder %v76, %v29
    %vm78 = vcmp.eq.s32.totalorder %v76, %v30
    %v79 = vsel %vm77, 1, 0
    %v80 = vsel %vm78, 1, 0
    %v81 = vcvt.s32.f32 %v79
    %v82 = vcvt.s32.f32 %v80
    %v83 = vpack.c.bf16 %v81, %v81
    %v84 = vpack.c.bf16 %v82, %v82
    %s85 = scalar_lea.vmem [#allocation2], 128
    %v86 = vld [vmem:[%s85] sm:$0xf]
    %v87 = vld [vmem:[%s85 + $0x4] sm:$0xf]
    %v88 = vld [vmem:[%s85 + $0x8] sm:$0xf]
    %v89 = vld [vmem:[%s85 + $0xc] sm:$0xf]
    %v90 = vld [vmem:[%s85 + $0x10] sm:$0xf]
    %v91 = vld [vmem:[%s85 + $0x14] sm:$0xf]
    %v92 = vld [vmem:[%s85 + $0x18] sm:$0xf]
    %v93 = vld [vmem:[%s85 + $0x1c] sm:$0xf]
    %v94 = vld [vmem:[%s85 + $0x20] sm:$0xf]
    %v95 = vld [vmem:[%s85 + $0x24] sm:$0xf]
    %v96 = vld [vmem:[%s85 + $0x28] sm:$0xf]
    %v97 = vld [vmem:[%s85 + $0x2c] sm:$0xf]
    %v98 = vld [vmem:[%s85 + $0x30] sm:$0xf]
    %v99 = vld [vmem:[%s85 + $0x34] sm:$0xf]
    %v100 = vld [vmem:[%s85 + $0x38] sm:$0xf]
    %v101 = vld [vmem:[%s85 + $0x3c] sm:$0xf]
    %v102 = vld [vmem:[%s85 + $0x40] sm:$0xf]
    %v103 = vld [vmem:[%s85 + $0x44] sm:$0xf]
    %v104 = vld [vmem:[%s85 + $0x48] sm:$0xf]
    %v105 = vld [vmem:[%s85 + $0x4c] sm:$0xf]
    %v106 = vld [vmem:[%s85 + $0x50] sm:$0xf]
    %v107 = vld [vmem:[%s85 + $0x54] sm:$0xf]
    %v108 = vld [vmem:[%s85 + $0x58] sm:$0xf]
    %v109 = vld [vmem:[%s85 + $0x5c] sm:$0xf]
    %v110 = vld [vmem:[%s85 + $0x60] sm:$0xf]
    %v111 = vld [vmem:[%s85 + $0x64] sm:$0xf]
    %v112 = vld [vmem:[%s85 + $0x68] sm:$0xf]
    %v113 = vld [vmem:[%s85 + $0x6c] sm:$0xf]
    %v114 = vld [vmem:[%s85 + $0x70] sm:$0xf]
    %v115 = vld [vmem:[%s85 + $0x74] sm:$0xf]
    %v116 = vld [vmem:[%s85 + $0x78] sm:$0xf]
    %v117 = vld [vmem:[%s85 + $0x7c] sm:$0xf]
    %v150 = vunpack.c.l.b16 %v86
    %v151 = vunpack.c.l.b16 %v87
    %v152 = vunpack.c.l.b16 %v88
    %v153 = vunpack.c.l.b16 %v89
    %v154 = vunpack.c.l.b16 %v90
    %v155 = vunpack.c.l.b16 %v91
    %v156 = vunpack.c.l.b16 %v92
    %v157 = vunpack.c.l.b16 %v93
    %v158 = vunpack.c.l.b16 %v94
    %v159 = vunpack.c.l.b16 %v95
    %v160 = vunpack.c.l.b16 %v96
    %v161 = vunpack.c.l.b16 %v97
    %v162 = vunpack.c.l.b16 %v98
    %v163 = vunpack.c.l.b16 %v99
    %v164 = vunpack.c.l.b16 %v100
    %v165 = vunpack.c.l.b16 %v101
    %v166 = vunpack.c.l.b16 %v102
    %v167 = vunpack.c.l.b16 %v103
    %v168 = vunpack.c.l.b16 %v104
    %v169 = vunpack.c.l.b16 %v105
    %v170 = vunpack.c.l.b16 %v106
    %v171 = vunpack.c.l.b16 %v107
    %v172 = vunpack.c.l.b16 %v108
    %v173 = vunpack.c.l.b16 %v109
    %v174 = vunpack.c.l.b16 %v110
    %v175 = vunpack.c.l.b16 %v111
    %v176 = vunpack.c.l.b16 %v112
    %v177 = vunpack.c.l.b16 %v113
    %v178 = vunpack.c.l.b16 %v114
    %v179 = vunpack.c.l.b16 %v115
    %v180 = vunpack.c.l.b16 %v116
    %v181 = vunpack.c.l.b16 %v117
    %v182 = vpack.c.b16 %v151, %v150
    %v183 = vpack.c.b16 %v153, %v152
    %v184 = vpack.c.b16 %v155, %v154
    %v185 = vpack.c.b16 %v157, %v156
    %v186 = vpack.c.b16 %v159, %v158
    %v187 = vpack.c.b16 %v161, %v160
    %v188 = vpack.c.b16 %v163, %v162
    %v189 = vpack.c.b16 %v165, %v164
    %v190 = vpack.c.b16 %v167, %v166
    %v191 = vpack.c.b16 %v169, %v168
    %v192 = vpack.c.b16 %v171, %v170
    %v193 = vpack.c.b16 %v173, %v172
    %v194 = vpack.c.b16 %v175, %v174
    %v195 = vpack.c.b16 %v177, %v176
    %v196 = vpack.c.b16 %v179, %v178
    %v197 = vpack.c.b16 %v181, %v180
    %214 = vmatprep.subr.bf16.mxu0 0
    %215 = vmatpush1.bf16.msra.mxu0 %v182
    %216 = vmatprep.subr.bf16.mxu0 0
    %217 = vmatpush1.bf16.msra.mxu0 %v183
    %218 = vmatprep.subr.bf16.mxu0 0
    %219 = vmatpush1.bf16.msra.mxu0 %v184
    %220 = vmatprep.subr.bf16.mxu0 0
    %221 = vmatpush1.bf16.msra.mxu0 %v185
    %222 = vmatprep.subr.bf16.mxu0 0
    %223 = vmatpush1.bf16.msra.mxu0 %v186
    %224 = vmatprep.subr.bf16.mxu0 0
    %225 = vmatpush1.bf16.msra.mxu0 %v187
    %226 = vmatprep.subr.bf16.mxu0 0
    %227 = vmatpush1.bf16.msra.mxu0 %v188
    %228 = vmatprep.subr.bf16.mxu0 0
    %229 = vmatpush1.bf16.msra.mxu0 %v189
    %230 = vmatprep.subr.bf16.mxu0 0
    %231 = vmatpush1.bf16.msra.mxu0 %v190
    %232 = vmatprep.subr.bf16.mxu0 0
    %233 = vmatpush1.bf16.msra.mxu0 %v191
    %234 = vmatprep.subr.bf16.mxu0 0
    %235 = vmatpush1.bf16.msra.mxu0 %v192
    %236 = vmatprep.subr.bf16.mxu0 0
    %237 = vmatpush1.bf16.msra.mxu0 %v193
    %238 = vmatprep.subr.bf16.mxu0 0
    %239 = vmatpush1.bf16.msra.mxu0 %v194
    %240 = vmatprep.subr.bf16.mxu0 0
    %241 = vmatpush1.bf16.msra.mxu0 %v195
    %242 = vmatprep.subr.bf16.mxu0 0
    %243 = vmatpush1.bf16.msra.mxu0 %v196
    %244 = vmatprep.subr.bf16.mxu0 0
    %245 = vmatpush1.bf16.msra.mxu0 %v197
    %246 = vmatprep.mubr.bf16.mxu0 %v84
    %247 = vmatmul.mubr.bf16.gmra.mrb[0].mxu0 %v83
    %v248 = vpop.f32.mrb[0].mxu0
    %v249 = vadd.f32 0.0, %v248
    %v250 = vpop.f32.mrb[0].mxu0
    %v251 = vpop.f32.mrb[0].mxu0
    %v252 = vpop.f32.mrb[0].mxu0
    %253 = vdwg.mxu0
    %v286 = vunpack.c.l.b16 %v42
    %v287 = vunpack.c.l.b16 %v43
    %v288 = vunpack.c.l.b16 %v44
    %v289 = vunpack.c.l.b16 %v45
    %v290 = vunpack.c.l.b16 %v46
    %v291 = vunpack.c.l.b16 %v47
    %v292 = vunpack.c.l.b16 %v48
    %v293 = vunpack.c.l.b16 %v49
    %v294 = vunpack.c.l.b16 %v50
    %v295 = vunpack.c.l.b16 %v51
    %v296 = vunpack.c.l.b16 %v52
    %v297 = vunpack.c.l.b16 %v53
    %v298 = vunpack.c.l.b16 %v54
    %v299 = vunpack.c.l.b16 %v55
    %v300 = vunpack.c.l.b16 %v56
    %v301 = vunpack.c.l.b16 %v57
    %v302 = vunpack.c.l.b16 %v58
    %v303 = vunpack.c.l.b16 %v59
    %v304 = vunpack.c.l.b16 %v60
    %v305 = vunpack.c.l.b16 %v61
    %v306 = vunpack.c.l.b16 %v62
    %v307 = vunpack.c.l.b16 %v63
    %v308 = vunpack.c.l.b16 %v64
    %v309 = vunpack.c.l.b16 %v65
    %v310 = vunpack.c.l.b16 %v66
    %v311 = vunpack.c.l.b16 %v67
    %v312 = vunpack.c.l.b16 %v68
    %v313 = vunpack.c.l.b16 %v69
    %v314 = vunpack.c.l.b16 %v70
    %v315 = vunpack.c.l.b16 %v71
    %v316 = vunpack.c.l.b16 %v72
    %v317 = vunpack.c.l.b16 %v73
    %v318 = vpack.c.b16 %v287, %v286
    %v319 = vpack.c.b16 %v289, %v288
    %v320 = vpack.c.b16 %v291, %v290
    %v321 = vpack.c.b16 %v293, %v292
    %v322 = vpack.c.b16 %v295, %v294
    %v323 = vpack.c.b16 %v297, %v296
    %v324 = vpack.c.b16 %v299, %v298
    %v325 = vpack.c.b16 %v301, %v300
    %v326 = vpack.c.b16 %v303, %v302
    %v327 = vpack.c.b16 %v305, %v304
    %v328 = vpack.c.b16 %v307, %v306
    %v329 = vpack.c.b16 %v309, %v308
    %v330 = vpack.c.b16 %v311, %v310
    %v331 = vpack.c.b16 %v313, %v312
    %v332 = vpack.c.b16 %v315, %v314
    %v333 = vpack.c.b16 %v317, %v316
    %350 = vmatprep.subr.bf16.mxu0 0
    %351 = vmatpush1.bf16.msra.mxu0 %v318
    %352 = vmatprep.subr.bf16.mxu0 0
    %353 = vmatpush1.bf16.msra.mxu0 %v319
    %354 = vmatprep.subr.bf16.mxu0 0
    %355 = vmatpush1.bf16.msra.mxu0 %v320
    %356 = vmatprep.subr.bf16.mxu0 0
    %357 = vmatpush1.bf16.msra.mxu0 %v321
    %358 = vmatprep.subr.bf16.mxu0 0
    %359 = vmatpush1.bf16.msra.mxu0 %v322
    %360 = vmatprep.subr.bf16.mxu0 0
    %361 = vmatpush1.bf16.msra.mxu0 %v323
    %362 = vmatprep.subr.bf16.mxu0 0
    %363 = vmatpush1.bf16.msra.mxu0 %v324
    %364 = vmatprep.subr.bf16.mxu0 0
    %365 = vmatpush1.bf16.msra.mxu0 %v325
    %366 = vmatprep.subr.bf16.mxu0 0
    %367 = vmatpush1.bf16.msra.mxu0 %v326
    %368 = vmatprep.subr.bf16.mxu0 0
    %369 = vmatpush1.bf16.msra.mxu0 %v327
    %370 = vmatprep.subr.bf16.mxu0 0
    %371 = vmatpush1.bf16.msra.mxu0 %v328
    %372 = vmatprep.subr.bf16.mxu0 0
    %373 = vmatpush1.bf16.msra.mxu0 %v329
    %374 = vmatprep.subr.bf16.mxu0 0
    %375 = vmatpush1.bf16.msra.mxu0 %v330
    %376 = vmatprep.subr.bf16.mxu0 0
    %377 = vmatpush1.bf16.msra.mxu0 %v331
    %378 = vmatprep.subr.bf16.mxu0 0
    %379 = vmatpush1.bf16.msra.mxu0 %v332
    %380 = vmatprep.subr.bf16.mxu0 0
    %381 = vmatpush1.bf16.msra.mxu0 %v333
    %382 = vmatprep.mubr.bf16.mxu0 %v41
    %383 = vmatmul.mubr.bf16.gmra.mrb[0].mxu0 %v40
    %v384 = vpop.f32.mrb[0].mxu0
    %v385 = vadd.f32 %v249, %v384
    %v386 = vpop.f32.mrb[0].mxu0
    %v387 = vpop.f32.mrb[0].mxu0
    %v388 = vpop.f32.mrb[0].mxu0
    %389 = vdwg.mxu0
    %390 = vset.pattern.permute.xlu0 2
    %391 = vperm.xlu0 %390, %v27
    %v392 = vpop.permute.xlu0 %391
    %vm393 = vcmp.eq.s32.totalorder %v392, %v29
    %vm394 = vcmp.eq.s32.totalorder %v392, %v30
    %v395 = vsel %vm393, 1, 0
    %v396 = vsel %vm394, 1, 0
    %v397 = vcvt.s32.f32 %v395
    %v398 = vcvt.s32.f32 %v396
    %v399 = vpack.c.bf16 %v397, %v397
    %v400 = vpack.c.bf16 %v398, %v398
    %s401 = scalar_lea.vmem [#allocation2], 256
    %v402 = vld [vmem:[%s401] sm:$0xf]
    %v403 = vld [vmem:[%s401 + $0x4] sm:$0xf]
    %v404 = vld [vmem:[%s401 + $0x8] sm:$0xf]
    %v405 = vld [vmem:[%s401 + $0xc] sm:$0xf]
    %v406 = vld [vmem:[%s401 + $0x10] sm:$0xf]
    %v407 = vld [vmem:[%s401 + $0x14] sm:$0xf]
    %v408 = vld [vmem:[%s401 + $0x18] sm:$0xf]
    %v409 = vld [vmem:[%s401 + $0x1c] sm:$0xf]
    %v410 = vld [vmem:[%s401 + $0x20] sm:$0xf]
    %v411 = vld [vmem:[%s401 + $0x24] sm:$0xf]
    %v412 = vld [vmem:[%s401 + $0x28] sm:$0xf]
    %v413 = vld [vmem:[%s401 + $0x2c] sm:$0xf]
    %v414 = vld [vmem:[%s401 + $0x30] sm:$0xf]
    %v415 = vld [vmem:[%s401 + $0x34] sm:$0xf]
    %v416 = vld [vmem:[%s401 + $0x38] sm:$0xf]
    %v417 = vld [vmem:[%s401 + $0x3c] sm:$0xf]
    %v418 = vld [vmem:[%s401 + $0x40] sm:$0xf]
    %v419 = vld [vmem:[%s401 + $0x44] sm:$0xf]
    %v420 = vld [vmem:[%s401 + $0x48] sm:$0xf]
    %v421 = vld [vmem:[%s401 + $0x4c] sm:$0xf]
    %v422 = vld [vmem:[%s401 + $0x50] sm:$0xf]
    %v423 = vld [vmem:[%s401 + $0x54] sm:$0xf]
    %v424 = vld [vmem:[%s401 + $0x58] sm:$0xf]
    %v425 = vld [vmem:[%s401 + $0x5c] sm:$0xf]
    %v426 = vld [vmem:[%s401 + $0x60] sm:$0xf]
    %v427 = vld [vmem:[%s401 + $0x64] sm:$0xf]
    %v428 = vld [vmem:[%s401 + $0x68] sm:$0xf]
    %v429 = vld [vmem:[%s401 + $0x6c] sm:$0xf]
    %v430 = vld [vmem:[%s401 + $0x70] sm:$0xf]
    %v431 = vld [vmem:[%s401 + $0x74] sm:$0xf]
    %v432 = vld [vmem:[%s401 + $0x78] sm:$0xf]
    %v433 = vld [vmem:[%s401 + $0x7c] sm:$0xf]
    %v466 = vunpack.c.l.b16 %v402
    %v467 = vunpack.c.l.b16 %v403
    %v468 = vunpack.c.l.b16 %v404
    %v469 = vunpack.c.l.b16 %v405
    %v470 = vunpack.c.l.b16 %v406
    %v471 = vunpack.c.l.b16 %v407
    %v472 = vunpack.c.l.b16 %v408
    %v473 = vunpack.c.l.b16 %v409
    %v474 = vunpack.c.l.b16 %v410
    %v475 = vunpack.c.l.b16 %v411
    %v476 = vunpack.c.l.b16 %v412
    %v477 = vunpack.c.l.b16 %v413
    %v478 = vunpack.c.l.b16 %v414
    %v479 = vunpack.c.l.b16 %v415
    %v480 = vunpack.c.l.b16 %v416
    %v481 = vunpack.c.l.b16 %v417
    %v482 = vunpack.c.l.b16 %v418
    %v483 = vunpack.c.l.b16 %v419
    %v484 = vunpack.c.l.b16 %v420
    %v485 = vunpack.c.l.b16 %v421
    %v486 = vunpack.c.l.b16 %v422
    %v487 = vunpack.c.l.b16 %v423
    %v488 = vunpack.c.l.b16 %v424
    %v489 = vunpack.c.l.b16 %v425
    %v490 = vunpack.c.l.b16 %v426
    %v491 = vunpack.c.l.b16 %v427
    %v492 = vunpack.c.l.b16 %v428
    %v493 = vunpack.c.l.b16 %v429
    %v494 = vunpack.c.l.b16 %v430
    %v495 = vunpack.c.l.b16 %v431
    %v496 = vunpack.c.l.b16 %v432
    %v497 = vunpack.c.l.b16 %v433
    %v498 = vpack.c.b16 %v467, %v466
    %v499 = vpack.c.b16 %v469, %v468
    %v500 = vpack.c.b16 %v471, %v470
    %v501 = vpack.c.b16 %v473, %v472
    %v502 = vpack.c.b16 %v475, %v474
    %v503 = vpack.c.b16 %v477, %v476
    %v504 = vpack.c.b16 %v479, %v478
    %v505 = vpack.c.b16 %v481, %v480
    %v506 = vpack.c.b16 %v483, %v482
    %v507 = vpack.c.b16 %v485, %v484
    %v508 = vpack.c.b16 %v487, %v486
    %v509 = vpack.c.b16 %v489, %v488
    %v510 = vpack.c.b16 %v491, %v490
    %v511 = vpack.c.b16 %v493, %v492
    %v512 = vpack.c.b16 %v495, %v494
    %v513 = vpack.c.b16 %v497, %v496
    %530 = vmatprep.subr.bf16.mxu0 0
    %531 = vmatpush1.bf16.msra.mxu0 %v498
    %532 = vmatprep.subr.bf16.mxu0 0
    %533 = vmatpush1.bf16.msra.mxu0 %v499
    %534 = vmatprep.subr.bf16.mxu0 0
    %535 = vmatpush1.bf16.msra.mxu0 %v500
    %536 = vmatprep.subr.bf16.mxu0 0
    %537 = vmatpush1.bf16.msra.mxu0 %v501
    %538 = vmatprep.subr.bf16.mxu0 0
    %539 = vmatpush1.bf16.msra.mxu0 %v502
    %540 = vmatprep.subr.bf16.mxu0 0
    %541 = vmatpush1.bf16.msra.mxu0 %v503
    %542 = vmatprep.subr.bf16.mxu0 0
    %543 = vmatpush1.bf16.msra.mxu0 %v504
    %544 = vmatprep.subr.bf16.mxu0 0
    %545 = vmatpush1.bf16.msra.mxu0 %v505
    %546 = vmatprep.subr.bf16.mxu0 0
    %547 = vmatpush1.bf16.msra.mxu0 %v506
    %548 = vmatprep.subr.bf16.mxu0 0
    %549 = vmatpush1.bf16.msra.mxu0 %v507
    %550 = vmatprep.subr.bf16.mxu0 0
    %551 = vmatpush1.bf16.msra.mxu0 %v508
    %552 = vmatprep.subr.bf16.mxu0 0
    %553 = vmatpush1.bf16.msra.mxu0 %v509
    %554 = vmatprep.subr.bf16.mxu0 0
    %555 = vmatpush1.bf16.msra.mxu0 %v510
    %556 = vmatprep.subr.bf16.mxu0 0
    %557 = vmatpush1.bf16.msra.mxu0 %v511
    %558 = vmatprep.subr.bf16.mxu0 0
    %559 = vmatpush1.bf16.msra.mxu0 %v512
    %560 = vmatprep.subr.bf16.mxu0 0
    %561 = vmatpush1.bf16.msra.mxu0 %v513
    %562 = vmatprep.mubr.bf16.mxu0 %v400
    %563 = vmatmul.mubr.bf16.gmra.mrb[0].mxu0 %v399
    %v564 = vpop.f32.mrb[0].mxu0
    %v565 = vadd.f32 0.0, %v564
    %v566 = vpop.f32.mrb[0].mxu0
    %v567 = vpop.f32.mrb[0].mxu0
    %v568 = vpop.f32.mrb[0].mxu0
    %569 = vdwg.mxu0
    %v570 = vadd.f32 %v385, %v565
    %571 = vset.pattern.permute.xlu0 3
    %572 = vperm.xlu0 %571, %v27
    %v573 = vpop.permute.xlu0 %572
    %vm574 = vcmp.eq.s32.totalorder %v573, %v29
    %vm575 = vcmp.eq.s32.totalorder %v573, %v30
    %v576 = vsel %vm574, 1, 0
    %v577 = vsel %vm575, 1, 0
    %v578 = vcvt.s32.f32 %v576
    %v579 = vcvt.s32.f32 %v577
    %v580 = vpack.c.bf16 %v578, %v578
    %v581 = vpack.c.bf16 %v579, %v579
    %s582 = scalar_lea.vmem [#allocation2], 384
    %v583 = vld [vmem:[%s582] sm:$0xf]
    %v584 = vld [vmem:[%s582 + $0x4] sm:$0xf]
    %v585 = vld [vmem:[%s582 + $0x8] sm:$0xf]
    %v586 = vld [vmem:[%s582 + $0xc] sm:$0xf]
    %v587 = vld [vmem:[%s582 + $0x10] sm:$0xf]
    %v588 = vld [vmem:[%s582 + $0x14] sm:$0xf]
    %v589 = vld [vmem:[%s582 + $0x18] sm:$0xf]
    %v590 = vld [vmem:[%s582 + $0x1c] sm:$0xf]
    %v591 = vld [vmem:[%s582 + $0x20] sm:$0xf]
    %v592 = vld [vmem:[%s582 + $0x24] sm:$0xf]
    %v593 = vld [vmem:[%s582 + $0x28] sm:$0xf]
    %v594 = vld [vmem:[%s582 + $0x2c] sm:$0xf]
    %v595 = vld [vmem:[%s582 + $0x30] sm:$0xf]
    %v596 = vld [vmem:[%s582 + $0x34] sm:$0xf]
    %v597 = vld [vmem:[%s582 + $0x38] sm:$0xf]
    %v598 = vld [vmem:[%s582 + $0x3c] sm:$0xf]
    %v599 = vld [vmem:[%s582 + $0x40] sm:$0xf]
    %v600 = vld [vmem:[%s582 + $0x44] sm:$0xf]
    %v601 = vld [vmem:[%s582 + $0x48] sm:$0xf]
    %v602 = vld [vmem:[%s582 + $0x4c] sm:$0xf]
    %v603 = vld [vmem:[%s582 + $0x50] sm:$0xf]
    %v604 = vld [vmem:[%s582 + $0x54] sm:$0xf]
    %v605 = vld [vmem:[%s582 + $0x58] sm:$0xf]
    %v606 = vld [vmem:[%s582 + $0x5c] sm:$0xf]
    %v607 = vld [vmem:[%s582 + $0x60] sm:$0xf]
    %v608 = vld [vmem:[%s582 + $0x64] sm:$0xf]
    %v609 = vld [vmem:[%s582 + $0x68] sm:$0xf]
    %v610 = vld [vmem:[%s582 + $0x6c] sm:$0xf]
    %v611 = vld [vmem:[%s582 + $0x70] sm:$0xf]
    %v612 = vld [vmem:[%s582 + $0x74] sm:$0xf]
    %v613 = vld [vmem:[%s582 + $0x78] sm:$0xf]
    %v614 = vld [vmem:[%s582 + $0x7c] sm:$0xf]
    %v647 = vunpack.c.l.b16 %v583
    %v648 = vunpack.c.l.b16 %v584
    %v649 = vunpack.c.l.b16 %v585
    %v650 = vunpack.c.l.b16 %v586
    %v651 = vunpack.c.l.b16 %v587
    %v652 = vunpack.c.l.b16 %v588
    %v653 = vunpack.c.l.b16 %v589
    %v654 = vunpack.c.l.b16 %v590
    %v655 = vunpack.c.l.b16 %v591
    %v656 = vunpack.c.l.b16 %v592
    %v657 = vunpack.c.l.b16 %v593
    %v658 = vunpack.c.l.b16 %v594
    %v659 = vunpack.c.l.b16 %v595
    %v660 = vunpack.c.l.b16 %v596
    %v661 = vunpack.c.l.b16 %v597
    %v662 = vunpack.c.l.b16 %v598
    %v663 = vunpack.c.l.b16 %v599
    %v664 = vunpack.c.l.b16 %v600
    %v665 = vunpack.c.l.b16 %v601
    %v666 = vunpack.c.l.b16 %v602
    %v667 = vunpack.c.l.b16 %v603
    %v668 = vunpack.c.l.b16 %v604
    %v669 = vunpack.c.l.b16 %v605
    %v670 = vunpack.c.l.b16 %v606
    %v671 = vunpack.c.l.b16 %v607
    %v672 = vunpack.c.l.b16 %v608
    %v673 = vunpack.c.l.b16 %v609
    %v674 = vunpack.c.l.b16 %v610
    %v675 = vunpack.c.l.b16 %v611
    %v676 = vunpack.c.l.b16 %v612
    %v677 = vunpack.c.l.b16 %v613
    %v678 = vunpack.c.l.b16 %v614
    %v679 = vpack.c.b16 %v648, %v647
    %v680 = vpack.c.b16 %v650, %v649
    %v681 = vpack.c.b16 %v652, %v651
    %v682 = vpack.c.b16 %v654, %v653
    %v683 = vpack.c.b16 %v656, %v655
    %v684 = vpack.c.b16 %v658, %v657
    %v685 = vpack.c.b16 %v660, %v659
    %v686 = vpack.c.b16 %v662, %v661
    %v687 = vpack.c.b16 %v664, %v663
    %v688 = vpack.c.b16 %v666, %v665
    %v689 = vpack.c.b16 %v668, %v667
    %v690 = vpack.c.b16 %v670, %v669
    %v691 = vpack.c.b16 %v672, %v671
    %v692 = vpack.c.b16 %v674, %v673
    %v693 = vpack.c.b16 %v676, %v675
    %v694 = vpack.c.b16 %v678, %v677
    %711 = vmatprep.subr.bf16.mxu0 0
    %712 = vmatpush1.bf16.msra.mxu0 %v679
    %713 = vmatprep.subr.bf16.mxu0 0
    %714 = vmatpush1.bf16.msra.mxu0 %v680
    %715 = vmatprep.subr.bf16.mxu0 0
    %716 = vmatpush1.bf16.msra.mxu0 %v681
    %717 = vmatprep.subr.bf16.mxu0 0
    %718 = vmatpush1.bf16.msra.mxu0 %v682
    %719 = vmatprep.subr.bf16.mxu0 0
    %720 = vmatpush1.bf16.msra.mxu0 %v683
    %721 = vmatprep.subr.bf16.mxu0 0
    %722 = vmatpush1.bf16.msra.mxu0 %v684
    %723 = vmatprep.subr.bf16.mxu0 0
    %724 = vmatpush1.bf16.msra.mxu0 %v685
    %725 = vmatprep.subr.bf16.mxu0 0
    %726 = vmatpush1.bf16.msra.mxu0 %v686
    %727 = vmatprep.subr.bf16.mxu0 0
    %728 = vmatpush1.bf16.msra.mxu0 %v687
    %729 = vmatprep.subr.bf16.mxu0 0
    %730 = vmatpush1.bf16.msra.mxu0 %v688
    %731 = vmatprep.subr.bf16.mxu0 0
    %732 = vmatpush1.bf16.msra.mxu0 %v689
    %733 = vmatprep.subr.bf16.mxu0 0
    %734 = vmatpush1.bf16.msra.mxu0 %v690
    %735 = vmatprep.subr.bf16.mxu0 0
    %736 = vmatpush1.bf16.msra.mxu0 %v691
    %737 = vmatprep.subr.bf16.mxu0 0
    %738 = vmatpush1.bf16.msra.mxu0 %v692
    %739 = vmatprep.subr.bf16.mxu0 0
    %740 = vmatpush1.bf16.msra.mxu0 %v693
    %741 = vmatprep.subr.bf16.mxu0 0
    %742 = vmatpush1.bf16.msra.mxu0 %v694
    %743 = vmatprep.mubr.bf16.mxu0 %v581
    %744 = vmatmul.mubr.bf16.gmra.mrb[0].mxu0 %v580
    %v745 = vpop.f32.mrb[0].mxu0
    %v746 = vadd.f32 0.0, %v745
    %v747 = vpop.f32.mrb[0].mxu0
    %v748 = vpop.f32.mrb[0].mxu0
    %v749 = vpop.f32.mrb[0].mxu0
    %750 = vdwg.mxu0
    %v751 = vadd.f32 %v570, %v746
    %752 = vst [vmem:[#allocation5] sm:$0xff] %v751
    // Predicated region
    $region14: #{tpu_custom_call.1} parent=1 // pred_check
      _
    $region15: #{tpu_custom_call.1} parent=1 // pred_check_branch
      %754 = sbr.rel (0) target = $region17
    $region16: #{tpu_custom_call.1} parent=1 // pred_region
      %s756 = ssub.s32 128, 128
      %757 = vsyncadd [#allocation4], %s756
      %s759 = sshll.u32 [#allocation5], 4
      %s760 = int_to_ptr.vmem [resolvable:$true] %s759
      %762 = dma.vmem_to_hbm [thread:$0]  %s760, 128, %s2, [#allocation4]
    $region17: #{tpu_custom_call.1} parent=1 // pred_fallthru
      _
    // Predicated region
    $region18: #{tpu_custom_call.1} parent=1 // pred_check
      _
    $region19: #{tpu_custom_call.1} parent=1 // pred_check_branch
      %764 = sbr.rel (0) target = $region21
    $region20: #{tpu_custom_call.1} parent=1 // pred_region
      %765 = dma.done [#allocation4], 128
    $region21: #{tpu_custom_call.1} parent=1 // pred_fallthru
      _
    %766 = vsyncpa [#allocation3], 1
    %767 = vsyncpa [#allocation4], 1

</llo_original>
